<compile_context>
chip_gen: v5e
topology: v5e:2x2
jax: 0.10.0
libtpu: 0.0.40
codegen_flags: <defaults>
</compile_context>

<pallas_src>
import functools
import numpy as np

import jax
import jax.numpy as jnp
from jax.experimental import pallas as pl
from jax.experimental.pallas import tpu as pltpu


def _round_up(a, b):
    return -(-a // b) * b


# ----------------------------- Pallas kernel -------------------------------
def _grpo_kernel(*refs, beta, epsilon, has_old, tv, vocab, mask_pad):
    if has_old:
        (ids_ref, ref_ref, old_ref, adv_ref, mask_ref,
         xT_ref, w_ref, b_ref, out_ref, st_sc) = refs
    else:
        (ids_ref, ref_ref, adv_ref, mask_ref,
         xT_ref, w_ref, b_ref, out_ref, st_sc) = refs
        old_ref = None

    j = pl.program_id(1)
    n_v = pl.num_programs(1)
    tn = st_sc.shape[1]

    @pl.when(j == 0)
    def _():
        st_sc[...] = jnp.zeros_like(st_sc)
        st_sc[0:1, :] = jnp.full((1, tn), -jnp.inf, jnp.float32)

    # logits tile, vocab-major, canonical (M,K)x(K,N): (tv,H) @ (H,tn) -> (tv,tn).
    # Operands stay in their native dtype (bf16 friendly); accumulate in f32.
    logits = jax.lax.dot_general(
        w_ref[...], xT_ref[...],
        dimension_numbers=(((1,), (0,)), ((), ())),
        preferred_element_type=jnp.float32)
    logits = logits + b_ref[...]                        # bias (tv,1), lane-broadcast

    # vocab-row index of every logit in this tile (sublane iota)
    rows = j * tv + jax.lax.broadcasted_iota(jnp.int32, logits.shape, 0)
    hit = rows == ids_ref[...]                          # ids: (1, tn) lane-dense
    # TODO(synk): out-of-range input_id silently selects no logit (logps = -lse);
    # the torch take_along_axis path behaves differently for invalid ids.

    def _update(lg):
        # online log-sum-exp over the vocab (sublane) axis; per-row state (1, tn)
        # lives in one fused scratch: row0 = running max, row1 = running sum-exp,
        # row2 = selected (target-token) logit.
        m_prev = st_sc[0:1, :]
        m_new = jnp.maximum(m_prev, lg.max(axis=0, keepdims=True))
        st_sc[1:2, :] = (st_sc[1:2, :] * jnp.exp(m_prev - m_new)
                         + jnp.exp(lg - m_new).sum(axis=0, keepdims=True))
        st_sc[0:1, :] = m_new
        st_sc[2:3, :] = (st_sc[2:3, :]
                         + jnp.where(hit, lg, 0.0).sum(axis=0, keepdims=True))

    if mask_pad:
        # vocab padding only exists in the final vocab tile -> predicate the
        # compare+select there; interior tiles take the plain path.
        @pl.when(j == n_v - 1)
        def _():
            _update(jnp.where(rows < vocab, logits, jnp.float32(-1e30)))

        @pl.when(j < n_v - 1)
        def _():
            _update(logits)
    else:
        _update(logits)

    @pl.when(j == n_v - 1)
    def _():
        lse = st_sc[0:1, :] + jnp.log(st_sc[1:2, :])
        logps = st_sc[2:3, :] - lse                     # selective_log_softmax, (1, tn)
        d = ref_ref[...] - logps
        kl = jnp.exp(d) - d - 1.0
        old = old_ref[...] if has_old else logps        # detach(per_token_logps)
        coef_1 = jnp.exp(logps - old)
        coef_2 = jnp.clip(coef_1, 1.0 - epsilon, 1.0 + epsilon)
        adv = adv_ref[...]
        l1 = coef_1 * adv
        l2 = coef_2 * adv
        ptl = -(jnp.minimum(l1, l2) - beta * kl)
        # single stacked lane-dense store (4, tn)
        out_ref[...] = jnp.concatenate(
            [logps, kl, (l1 < l2).astype(jnp.float32), ptl * mask_ref[...]], axis=0)


# --------------------------- generation detection ----------------------------
def _tpu_config():
    """Return (generation tag, per-core VMEM capacity in bytes)."""
    kind = ""
    try:
        kind = jax.devices()[0].device_kind.lower()
    except Exception:
        pass
    if "v7" in kind:
        gen = "v7x"
    elif "v5" in kind and ("lite" in kind or "5e" in kind):
        gen = "v5e"
    elif "v6" in kind:
        gen = "v6e"
    else:
        gen = "v6e"   # sane default (v4/v5p/unknown behave like the big-VMEM chips)
    vmem_cap = None
    try:
        vmem_cap = int(pltpu.get_tpu_info().vmem_capacity_bytes)
    except Exception:
        vmem_cap = None
    if not vmem_cap or vmem_cap <= 0:
        vmem_cap = 64 * 2**20 if gen == "v7x" else 128 * 2**20
    return gen, vmem_cap


def _block_spec(shape, index_map, buffers=None):
    """BlockSpec with optional pipeline depth (gracefully degrades if unsupported)."""
    if buffers is not None and hasattr(pl, "Buffered"):
        try:
            return pl.BlockSpec(shape, index_map, pipeline_mode=pl.Buffered(buffers))
        except TypeError:
            pass
    return pl.BlockSpec(shape, index_map)


# ------------------------------ JAX wrapper ---------------------------------
def fused_linear_grpo_forward(x, weight, input_id, attention_mask, advantage,
                              ref_per_token_logps, old_per_token_logps=None,
                              bias=None, beta=0.04, epsilon=0.2, chunk_size=1024,
                              tn=None, tv=None):
    B, T, H = x.shape
    V, Hw = weight.shape
    assert Hw == H, "weight must be (V, H)"
    N = B * T
    f32 = jnp.float32
    has_old = old_per_token_logps is not None

    gen, vmem_cap = _tpu_config()

    # ---- generation-aware default tiles (roofline: tn ~ FLOPs per weight byte) ----
    if tn is None:
        tn = {"v5e": 256, "v6e": 1024, "v7x": 512}[gen]
    if tv is None:
        tv = 1024
    tn, tv = int(tn), int(tv)

    # ---- clamp tiles to the problem; keep every BlockSpec (8,128)-legal ----
    n8 = _round_up(N, 8)
    tn = n8 if n8 <= tn else _round_up(tn, 128)
    # v7x megacore: row axis is the only "parallel" one -> aim for >= 2 row tiles
    if gen == "v7x" and tn >= n8 and n8 > 128:
        tn = _round_up(-(-n8 // 2), 128)
    v128 = _round_up(V, 128)
    tv = v128 if v128 <= tv else _round_up(tv, 128)

    mm_dtype = jnp.promote_types(x.dtype, weight.dtype)
    isz = jnp.dtype(mm_dtype).itemsize
    x_bufs = 1 if gen == "v7x" else 2     # x tile changes only per row tile -> 1 buf on v7x
    w_bufs = 3 if gen == "v5e" else 2     # smooth the weight DMA stream on v5e
    n_row_in = 5 if has_old else 4

    def _vmem_est(tn_, tv_):
        return (x_bufs * H * tn_ * isz            # activation tile(s)
                + w_bufs * tv_ * H * isz          # weight tile(s)
                + w_bufs * tv_ * 4                # bias tiles
                + 2 * n_row_in * tn_ * 4          # per-row inputs (double-buffered)
                + 2 * 4 * tn_ * 4                 # packed output
                + 8 * tn_ * 4                     # fused scratch
                + 5 * tn_ * tv_ * 4)              # ~5 live (tv,tn) f32/i32 temporaries

    budget = max(32 * 2**20, vmem_cap - 16 * 2**20)   # leave Mosaic headroom
    while _vmem_est(tn, tv) > budget and tv > 256:
        tv = max(256, _round_up(tv // 2, 128))
    while _vmem_est(tn, tv) > budget and tn > 256:
        tn = max(256, _round_up(tn // 2, 128))

    N_pad = _round_up(N, tn)
    V_pad = _round_up(V, tv)
    n_pad, v_pad = N_pad - N, V_pad - V

    # ---- matmul operands stay in native dtype; one wrapper-side transpose ----
    x2 = x.reshape(N, H).astype(mm_dtype)
    if n_pad:
        x2 = jnp.pad(x2, ((0, n_pad), (0, 0)))
    xT = x2.T                                           # (H, N_pad): canonical RHS
    w = weight.astype(mm_dtype)                         # (V, H), untransposed
    if v_pad:
        w = jnp.pad(w, ((0, v_pad), (0, 0)))            # padded rows masked in-kernel
    b = (bias if bias is not None else jnp.zeros((V,), f32)).astype(f32)
    if v_pad:
        b = jnp.pad(b, (0, v_pad))
    b2 = b.reshape(V_pad, 1)

    # per-row tensors, lane-dense (1, N_pad)
    ids_r = input_id.reshape(1, N).astype(jnp.int32)
    ref_r = ref_per_token_logps.reshape(1, N).astype(f32)
    mask_r = attention_mask.reshape(1, N).astype(f32)
    adv_r = jnp.broadcast_to(advantage.reshape(B, -1), (B, T)).reshape(1, N).astype(f32)
    old_r = old_per_token_logps.reshape(1, N).astype(f32) if has_old else None
    if n_pad:
        pad_row = lambda a: jnp.pad(a, ((0, 0), (0, n_pad)))
        ids_r, ref_r, mask_r, adv_r = map(pad_row, (ids_r, ref_r, mask_r, adv_r))
        if has_old:
            old_r = pad_row(old_r)

    grid = (N_pad // tn, V_pad // tv)
    row_spec = pl.BlockSpec((1, tn), lambda i, j: (0, i))
    x_spec = _block_spec((H, tn), lambda i, j: (0, i),
                         buffers=1 if x_bufs == 1 else None)
    w_spec = _block_spec((tv, H), lambda i, j: (j, 0),
                         buffers=3 if w_bufs == 3 else None)
    b_spec = pl.BlockSpec((tv, 1), lambda i, j: (j, 0))

    in_specs = ([row_spec, row_spec] + ([row_spec] if has_old else [])
                + [row_spec, row_spec, x_spec, w_spec, b_spec])
    inputs = ([ids_r, ref_r] + ([old_r] if has_old else [])
              + [adv_r, mask_r, xT, w, b2])

    est = _vmem_est(tn, tv)
    vmem_limit = int(min(budget, max(32 * 2**20, int(1.5 * est))))

    kernel = functools.partial(_grpo_kernel, beta=float(beta), epsilon=float(epsilon),
                               has_old=has_old, tv=tv, vocab=V, mask_pad=bool(v_pad))

    packed = pl.pallas_call(
        kernel,
        out_shape=jax.ShapeDtypeStruct((4, N_pad), f32),
        grid_spec=pltpu.PrefetchScalarGridSpec(
            num_scalar_prefetch=0,
            grid=grid,
            in_specs=in_specs,
            out_specs=pl.BlockSpec((4, tn), lambda i, j: (0, i)),
            scratch_shapes=[pltpu.VMEM((8, tn), f32)],   # rows 0-2: max / sum-exp / sel
        ),
        compiler_params=pltpu.CompilerParams(
            dimension_semantics=("parallel", "arbitrary"),
            vmem_limit_bytes=vmem_limit),
    )(*inputs)

    per_token_logps = packed[0, :N].reshape(B, T)
    kl = packed[1, :N].reshape(B, T)
    is_clipped = packed[2, :N].reshape(B, T)
    ptl_masked = packed[3, :N].reshape(B, T)

    # Final scalar glue: per-chunk mask-normalized loss (matches torch.chunk on dim 0).
    # NOTE: like the reference, a fully-masked chunk divides by zero (inf/NaN).
    mask_f = attention_mask.astype(f32)
    chunks = max(1, B // chunk_size)
    per_chunk = -(-B // chunks)
    loss = jnp.zeros((), f32)
    for c in range(chunks):
        s, e = c * per_chunk, min((c + 1) * per_chunk, B)
        loss = loss + ptl_masked[s:e].sum() / mask_f[s:e].sum()
    loss = loss / chunks
    mean_kl = (kl * mask_f).sum() / mask_f.sum()
    clip_ratio = (is_clipped * mask_f).sum() / mask_f.sum()
    return loss, (per_token_logps, mean_kl, clip_ratio)


class LigerFusedLinearGRPOLoss:
    """JAX/Pallas counterpart of the PyTorch module (forward only)."""

    def __init__(self, beta=0.04, epsilon=0.2, compiled=True):
        self.beta = beta
        self.epsilon = epsilon
        self.compiled = compiled  # TODO(synk): torch.compile flag has no Pallas equivalent

    def __call__(self, _input, weight, input_id, attention_mask, advantage,
                 ref_per_token_logps, old_per_token_logps=None, bias=None,
                 chunk_size=1024):
        return fused_linear_grpo_forward(
            _input, weight, input_id, attention_mask, advantage,
            ref_per_token_logps, old_per_token_logps, bias,
            beta=self.beta, epsilon=self.epsilon, chunk_size=chunk_size)


# ------------------------------ pure-JAX reference --------------------------
def _reference(x, weight, input_id, attention_mask, advantage, ref_lp, old_lp,
               bias, beta, epsilon, chunk_size):
    B, T, H = x.shape
    logits = jnp.einsum('bth,vh->btv', x.astype(jnp.float32), weight.astype(jnp.float32),
                        precision=jax.lax.Precision.HIGHEST)
    if bias is not None:
        logits = logits + bias
    logsm = jax.nn.log_softmax(logits, axis=-1)
    per_token_logps = jnp.take_along_axis(logsm, input_id[..., None], axis=-1)[..., 0]
    d = ref_lp - per_token_logps
    kl = jnp.exp(d) - d - 1.0
    old = old_lp if old_lp is not None else per_token_logps
    coef_1 = jnp.exp(per_token_logps - old)
    coef_2 = jnp.clip(coef_1, 1 - epsilon, 1 + epsilon)
    adv = jnp.broadcast_to(advantage.reshape(B, -1), (B, T))
    l1 = coef_1 * adv
    l2 = coef_2 * adv
    ptl = -(jnp.minimum(l1, l2) - beta * kl)
    mask = attention_mask.astype(jnp.float32)
    chunks = max(1, B // chunk_size)
    per_chunk = -(-B // chunks)
    loss = 0.0
    for c in range(chunks):
        s, e = c * per_chunk, min((c + 1) * per_chunk, B)
        loss = loss + (ptl[s:e] * mask[s:e]).sum() / mask[s:e].sum()
    loss = loss / chunks
    mean_kl = (kl * mask).sum() / mask.sum()
    clip_ratio = ((l1 < l2).astype(jnp.float32) * mask).sum() / mask.sum()
    return loss, (per_token_logps, mean_kl, clip_ratio)


# ----------------------------------- main ------------------------------------
if __name__ == "__main__":
    B, T, H, V = 2, 8, 32, 256
    key = jax.random.PRNGKey(0)
    ks = jax.random.split(key, 9)

    x = 0.1 * jax.random.normal(ks[0], (B, T, H), jnp.float32)
    weight = 0.1 * jax.random.normal(ks[1], (V, H), jnp.float32)   # lm_head weight (V, H)
    bias = 0.01 * jax.random.normal(ks[2], (V,), jnp.float32)
    input_id = jax.random.randint(ks[3], (B, T), 0, V, jnp.int32)
    attention_mask = (jax.random.uniform(ks[4], (B, T)) > 0.2).astype(jnp.float32)
    advantage = jax.random.normal(ks[5], (B, 1), jnp.float32)
    ref_per_token_logps = -jnp.abs(jax.random.normal(ks[6], (B, T), jnp.float32)) - 4.0
    old_per_token_logps = -jnp.abs(jax.random.normal(ks[7], (B, T), jnp.float32)) - 4.0

    mod = LigerFusedLinearGRPOLoss(beta=0.04, epsilon=0.2)

    # case 1: with old_per_token_logps + bias, vocab multiple of 128 (no padding path)
    loss, (ptl, mean_kl, clip_ratio) = mod(
        x, weight, input_id, attention_mask, advantage,
        ref_per_token_logps, old_per_token_logps, bias)
    jax.block_until_ready((loss, ptl, mean_kl, clip_ratio))

    ref_loss, (ref_ptl, ref_kl, ref_clip) = _reference(
        x, weight, input_id, attention_mask, advantage,
        ref_per_token_logps, old_per_token_logps, bias, 0.04, 0.2, 1024)
    np.testing.assert_allclose(np.asarray(ptl), np.asarray(ref_ptl), rtol=1e-3, atol=1e-3)
    np.testing.assert_allclose(float(loss), float(ref_loss), rtol=1e-3, atol=1e-3)
    np.testing.assert_allclose(float(mean_kl), float(ref_kl), rtol=1e-3, atol=1e-3)
    np.testing.assert_allclose(float(clip_ratio), float(ref_clip), rtol=1e-3, atol=1e-3)

    # case 2: no old_per_token_logps, no bias, ragged vocab (exercises padded-vocab mask)
    V2 = 200
    weight2 = weight[:V2]
    input_id2 = jax.random.randint(ks[8], (B, T), 0, V2, jnp.int32)
    loss2, (ptl2, kl2, clip2) = mod(
        x, weight2, input_id2, attention_mask, advantage, ref_per_token_logps, None, None)
    jax.block_until_ready((loss2, ptl2, kl2, clip2))
    r_loss2, (r_ptl2, r_kl2, r_clip2) = _reference(
        x, weight2, input_id2, attention_mask, advantage,
        ref_per_token_logps, None, None, 0.04, 0.2, 1024)
    np.testing.assert_allclose(np.asarray(ptl2), np.asarray(r_ptl2), rtol=1e-3, atol=1e-3)
    np.testing.assert_allclose(float(loss2), float(r_loss2), rtol=1e-3, atol=1e-3)
    np.testing.assert_allclose(float(kl2), float(r_kl2), rtol=1e-3, atol=1e-3)
    np.testing.assert_allclose(float(clip2), float(r_clip2), rtol=1e-3, atol=1e-3)

    print("KERNEL_OK")
</pallas_src>

<mosaic_0001>
module attributes {stable_mosaic.version = 11 : i64} {
  func.func @_grpo_kernel(%arg0: i32, %arg1: i32, %arg2: memref<1x16xi32, #tpu.memory_space<vmem>>, %arg3: memref<1x16xf32, #tpu.memory_space<vmem>>, %arg4: memref<1x16xf32, #tpu.memory_space<vmem>>, %arg5: memref<1x16xf32, #tpu.memory_space<vmem>>, %arg6: memref<1x16xf32, #tpu.memory_space<vmem>>, %arg7: memref<32x16xf32, #tpu.memory_space<vmem>>, %arg8: memref<256x32xf32, #tpu.memory_space<vmem>>, %arg9: memref<256x1xf32, #tpu.memory_space<vmem>>, %arg10: memref<4x16xf32, #tpu.memory_space<vmem>>, %arg11: memref<8x16xf32, #tpu.memory_space<vmem>>) attributes {dimension_semantics = [#tpu.dimension_semantics<parallel>, #tpu.dimension_semantics<arbitrary>], iteration_bounds = array<i64: 1, 1>, scalar_prefetch = 0 : i64, scratch_operands = 1 : i64, tpu.core_type = #tpu.core_type<tc>, window_params = [{transform_indices = @transform_0, window_bounds = array<i64: 1, 16>}, {transform_indices = @transform_1, window_bounds = array<i64: 1, 16>}, {transform_indices = @transform_2, window_bounds = array<i64: 1, 16>}, {transform_indices = @transform_3, window_bounds = array<i64: 1, 16>}, {transform_indices = @transform_4, window_bounds = array<i64: 1, 16>}, {transform_indices = @transform_5, window_bounds = array<i64: 32, 16>}, {transform_indices = @transform_6, window_bounds = array<i64: 256, 32>}, {transform_indices = @transform_7, window_bounds = array<i64: 256, 1>}, {transform_indices = @transform_8, window_bounds = array<i64: 4, 16>}]} {
    %c0_i32 = arith.constant 0 : i32
    %0 = arith.cmpi eq, %arg1, %c0_i32 : i32
    %1 = arith.extui %0 : i1 to i32
    %c0_i32_0 = arith.constant 0 : i32
    %2 = arith.cmpi ne, %1, %c0_i32_0 : i32
    scf.if %2 {
      %cst_24 = arith.constant 0.000000e+00 : f32
      %42 = vector.broadcast %cst_24 : f32 to vector<8x16xf32>
      %c0_25 = arith.constant 0 : index
      %c0_26 = arith.constant 0 : index
      %43 = vector.load %arg11[%c0_25, %c0_26] : memref<8x16xf32, #tpu.memory_space<vmem>>, vector<8x16xf32>
      tpu.vector_store %arg11[%c0_25, %c0_26], %42 {strides = array<i32>} : memref<8x16xf32, #tpu.memory_space<vmem>>, vector<8x16xf32>,
      %cst_27 = arith.constant 0xFF800000 : f32
      %44 = vector.broadcast %cst_27 : f32 to vector<1x16xf32>
      %c0_28 = arith.constant 0 : index
      %c0_29 = arith.constant 0 : index
      %45 = vector.load %arg11[%c0_28, %c0_29] : memref<8x16xf32, #tpu.memory_space<vmem>>, vector<1x16xf32>
      tpu.vector_store %arg11[%c0_28, %c0_29], %44 {strides = array<i32>} : memref<8x16xf32, #tpu.memory_space<vmem>>, vector<1x16xf32>,
    } else {
    }
    %c0 = arith.constant 0 : index
    %c0_1 = arith.constant 0 : index
    %3 = vector.load %arg8[%c0, %c0_1] : memref<256x32xf32, #tpu.memory_space<vmem>>, vector<256x32xf32>
    %c0_2 = arith.constant 0 : index
    %c0_3 = arith.constant 0 : index
    %4 = vector.load %arg7[%c0_2, %c0_3] : memref<32x16xf32, #tpu.memory_space<vmem>>, vector<32x16xf32>
    %cst = arith.constant dense<0.000000e+00> : vector<256x16xf32>
    %5 = tpu.matmul %3, %4, %cst {dimension_numbers = #tpu.dot_dimension_numbers<[1], [0], [0], [1], [0, 0, 1, 1], [], []>} : vector<256x32xf32>, vector<32x16xf32>, vector<256x16xf32> -> vector<256x16xf32>
    %c0_4 = arith.constant 0 : index
    %c0_5 = arith.constant 0 : index
    %6 = vector.load %arg9[%c0_4, %c0_5] : memref<256x1xf32, #tpu.memory_space<vmem>>, vector<256x1xf32>
    %7 = vector.broadcast %6 : vector<256x1xf32> to vector<256x16xf32>
    %8 = arith.addf %5, %7 : vector<256x16xf32>
    %c256_i32 = arith.constant 256 : i32
    %9 = arith.muli %arg1, %c256_i32 : i32
    %10 = tpu.iota {dimensions = array<i32: 0>} : vector<256x16xi32>
    %11 = vector.broadcast %9 : i32 to vector<256x16xi32>
    %12 = arith.addi %11, %10 : vector<256x16xi32>
    %c0_6 = arith.constant 0 : index
    %c0_7 = arith.constant 0 : index
    %13 = vector.load %arg2[%c0_6, %c0_7] : memref<1x16xi32, #tpu.memory_space<vmem>>, vector<1x16xi32>
    %14 = vector.broadcast %13 : vector<1x16xi32> to vector<256x16xi32>
    %15 = arith.cmpi eq, %12, %14 : vector<256x16xi32>
    %c0_8 = arith.constant 0 : index
    %c0_9 = arith.constant 0 : index
    %16 = vector.load %arg11[%c0_8, %c0_9] : memref<8x16xf32, #tpu.memory_space<vmem>>, vector<1x16xf32>
    %cst_10 = arith.constant dense<0xFF800000> : vector<16xf32>
    %17 = vector.multi_reduction <maximumf>, %8, %cst_10 [0] : vector<256x16xf32> to vector<16xf32>
    %18 = vector.shape_cast %17 : vector<16xf32> to vector<1x16xf32>
    %19 = arith.maximumf %16, %18 : vector<1x16xf32>
    %c1 = arith.constant 1 : index
    %c0_11 = arith.constant 0 : index
    %20 = vector.load %arg11[%c1, %c0_11] : memref<8x16xf32, #tpu.memory_space<vmem>>, vector<1x16xf32>
    %21 = arith.subf %16, %19 : vector<1x16xf32>
    %22 = math.exp %21 : vector<1x16xf32>
    %23 = arith.mulf %20, %22 : vector<1x16xf32>
    %24 = vector.broadcast %19 : vector<1x16xf32> to vector<256x16xf32>
    %25 = arith.subf %8, %24 : vector<256x16xf32>
    %26 = math.exp %25 : vector<256x16xf32>
    %cst_12 = arith.constant dense<0.000000e+00> : vector<16xf32>
    %27 = vector.multi_reduction <add>, %26, %cst_12 [0] : vector<256x16xf32> to vector<16xf32>
    %28 = vector.shape_cast %27 : vector<16xf32> to vector<1x16xf32>
    %29 = arith.addf %23, %28 : vector<1x16xf32>
    %c1_13 = arith.constant 1 : index
    %c0_14 = arith.constant 0 : index
    %30 = vector.load %arg11[%c1_13, %c0_14] : memref<8x16xf32, #tpu.memory_space<vmem>>, vector<1x16xf32>
    tpu.vector_store %arg11[%c1_13, %c0_14], %29 {strides = array<i32>} : memref<8x16xf32, #tpu.memory_space<vmem>>, vector<1x16xf32>,
    %c0_15 = arith.constant 0 : index
    %c0_16 = arith.constant 0 : index
    %31 = vector.load %arg11[%c0_15, %c0_16] : memref<8x16xf32, #tpu.memory_space<vmem>>, vector<1x16xf32>
    tpu.vector_store %arg11[%c0_15, %c0_16], %19 {strides = array<i32>} : memref<8x16xf32, #tpu.memory_space<vmem>>, vector<1x16xf32>,
    %c2 = arith.constant 2 : index
    %c0_17 = arith.constant 0 : index
    %32 = vector.load %arg11[%c2, %c0_17] : memref<8x16xf32, #tpu.memory_space<vmem>>, vector<1x16xf32>
    %cst_18 = arith.constant 0.000000e+00 : f32
    %33 = vector.broadcast %cst_18 : f32 to vector<256x16xf32>
    %34 = arith.select %15, %8, %33 : vector<256x16xi1>, vector<256x16xf32>
    %cst_19 = arith.constant dense<0.000000e+00> : vector<16xf32>
    %35 = vector.multi_reduction <add>, %34, %cst_19 [0] : vector<256x16xf32> to vector<16xf32>
    %36 = vector.shape_cast %35 : vector<16xf32> to vector<1x16xf32>
    %37 = arith.addf %32, %36 : vector<1x16xf32>
    %c2_20 = arith.constant 2 : index
    %c0_21 = arith.constant 0 : index
    %38 = vector.load %arg11[%c2_20, %c0_21] : memref<8x16xf32, #tpu.memory_space<vmem>>, vector<1x16xf32>
    tpu.vector_store %arg11[%c2_20, %c0_21], %37 {strides = array<i32>} : memref<8x16xf32, #tpu.memory_space<vmem>>, vector<1x16xf32>,
    %c0_i32_22 = arith.constant 0 : i32
    %39 = arith.cmpi eq, %arg1, %c0_i32_22 : i32
    %40 = arith.extui %39 : i1 to i32
    %c0_i32_23 = arith.constant 0 : i32
    %41 = arith.cmpi ne, %40, %c0_i32_23 : i32
    scf.if %41 {
      %c0_24 = arith.constant 0 : index
      %c0_25 = arith.constant 0 : index
      %42 = vector.load %arg11[%c0_24, %c0_25] : memref<8x16xf32, #tpu.memory_space<vmem>>, vector<1x16xf32>
      %c1_26 = arith.constant 1 : index
      %c0_27 = arith.constant 0 : index
      %43 = vector.load %arg11[%c1_26, %c0_27] : memref<8x16xf32, #tpu.memory_space<vmem>>, vector<1x16xf32>
      %44 = math.log %43 : vector<1x16xf32>
      %45 = arith.addf %42, %44 : vector<1x16xf32>
      %c2_28 = arith.constant 2 : index
      %c0_29 = arith.constant 0 : index
      %46 = vector.load %arg11[%c2_28, %c0_29] : memref<8x16xf32, #tpu.memory_space<vmem>>, vector<1x16xf32>
      %47 = arith.subf %46, %45 : vector<1x16xf32>
      %c0_30 = arith.constant 0 : index
      %c0_31 = arith.constant 0 : index
      %48 = vector.load %arg3[%c0_30, %c0_31] : memref<1x16xf32, #tpu.memory_space<vmem>>, vector<1x16xf32>
      %49 = arith.subf %48, %47 : vector<1x16xf32>
      %50 = math.exp %49 : vector<1x16xf32>
      %51 = arith.subf %50, %49 : vector<1x16xf32>
      %cst_32 = arith.constant 1.000000e+00 : f32
      %52 = vector.broadcast %cst_32 : f32 to vector<1x16xf32>
      %53 = arith.subf %51, %52 : vector<1x16xf32>
      %c0_33 = arith.constant 0 : index
      %c0_34 = arith.constant 0 : index
      %54 = vector.load %arg4[%c0_33, %c0_34] : memref<1x16xf32, #tpu.memory_space<vmem>>, vector<1x16xf32>
      %55 = arith.subf %47, %54 : vector<1x16xf32>
      %56 = math.exp %55 : vector<1x16xf32>
      %cst_35 = arith.constant 8.000000e-01 : f32
      %cst_36 = arith.constant 1.200000e+00 : f32
      %57 = vector.broadcast %cst_35 : f32 to vector<1x16xf32>
      %58 = arith.maximumf %57, %56 : vector<1x16xf32>
      %59 = vector.broadcast %cst_36 : f32 to vector<1x16xf32>
      %60 = arith.minimumf %59, %58 : vector<1x16xf32>
      %c0_37 = arith.constant 0 : index
      %c0_38 = arith.constant 0 : index
      %61 = vector.load %arg5[%c0_37, %c0_38] : memref<1x16xf32, #tpu.memory_space<vmem>>, vector<1x16xf32>
      %62 = arith.mulf %56, %61 : vector<1x16xf32>
      %63 = arith.mulf %60, %61 : vector<1x16xf32>
      %64 = arith.minimumf %62, %63 : vector<1x16xf32>
      %cst_39 = arith.constant 4.000000e-02 : f32
      %65 = vector.broadcast %cst_39 : f32 to vector<1x16xf32>
      %66 = arith.mulf %65, %53 : vector<1x16xf32>
      %67 = arith.subf %64, %66 : vector<1x16xf32>
      %cst_40 = arith.constant 0.000000e+00 : f32
      %68 = vector.broadcast %cst_40 : f32 to vector<1x16xf32>
      %69 = arith.subf %68, %67 : vector<1x16xf32>
      %70 = arith.cmpf olt, %62, %63 : vector<1x16xf32>
      %71 = arith.extui %70 : vector<1x16xi1> to vector<1x16xi32>
      %72 = arith.sitofp %71 : vector<1x16xi32> to vector<1x16xf32>
      %c0_41 = arith.constant 0 : index
      %c0_42 = arith.constant 0 : index
      %73 = vector.load %arg6[%c0_41, %c0_42] : memref<1x16xf32, #tpu.memory_space<vmem>>, vector<1x16xf32>
      %74 = arith.mulf %69, %73 : vector<1x16xf32>
      %75 = tpu.concatenate %47, %53, %72, %74 in 0 : vector<1x16xf32>, vector<1x16xf32>, vector<1x16xf32>, vector<1x16xf32> -> vector<4x16xf32>
      %c0_43 = arith.constant 0 : index
      %c0_44 = arith.constant 0 : index
      %76 = vector.load %arg10[%c0_43, %c0_44] : memref<4x16xf32, #tpu.memory_space<vmem>>, vector<4x16xf32>
      tpu.vector_store %arg10[%c0_43, %c0_44], %75 {strides = array<i32>} : memref<4x16xf32, #tpu.memory_space<vmem>>, vector<4x16xf32>,
    } else {
    }
    return
  }
  func.func @transform_0(%arg0: i32, %arg1: i32) -> (i32, i32) {
    %c0_i32 = arith.constant 0 : i32
    %c0_i32_0 = arith.constant 0 : i32
    return %c0_i32, %arg0 : i32, i32
  }
  func.func @transform_1(%arg0: i32, %arg1: i32) -> (i32, i32) {
    %c0_i32 = arith.constant 0 : i32
    %c0_i32_0 = arith.constant 0 : i32
    return %c0_i32, %arg0 : i32, i32
  }
  func.func @transform_2(%arg0: i32, %arg1: i32) -> (i32, i32) {
    %c0_i32 = arith.constant 0 : i32
    %c0_i32_0 = arith.constant 0 : i32
    return %c0_i32, %arg0 : i32, i32
  }
  func.func @transform_3(%arg0: i32, %arg1: i32) -> (i32, i32) {
    %c0_i32 = arith.constant 0 : i32
    %c0_i32_0 = arith.constant 0 : i32
    return %c0_i32, %arg0 : i32, i32
  }
  func.func @transform_4(%arg0: i32, %arg1: i32) -> (i32, i32) {
    %c0_i32 = arith.constant 0 : i32
    %c0_i32_0 = arith.constant 0 : i32
    return %c0_i32, %arg0 : i32, i32
  }
  func.func @transform_5(%arg0: i32, %arg1: i32) -> (i32, i32) {
    %c0_i32 = arith.constant 0 : i32
    %c0_i32_0 = arith.constant 0 : i32
    return %c0_i32, %arg0 : i32, i32
  }
  func.func @transform_6(%arg0: i32, %arg1: i32) -> (i32, i32) {
    %c0_i32 = arith.constant 0 : i32
    %c0_i32_0 = arith.constant 0 : i32
    return %arg1, %c0_i32 : i32, i32
  }
  func.func @transform_7(%arg0: i32, %arg1: i32) -> (i32, i32) {
    %c0_i32 = arith.constant 0 : i32
    %c0_i32_0 = arith.constant 0 : i32
    return %arg1, %c0_i32 : i32, i32
  }
  func.func @transform_8(%arg0: i32, %arg1: i32) -> (i32, i32) {
    %c0_i32 = arith.constant 0 : i32
    %c0_i32_0 = arith.constant 0 : i32
    return %c0_i32, %arg0 : i32, i32
  }
}

</mosaic_0001>

<llo_original>
// kernel: tpu_custom_call.1
$region0: #{tpu_custom_call.1}
  #allocation0 [shape = 'u32[]', space=smem, size = 0x4, offset = 0x4, fixed_abs, tag = 'smem constant byte address 0x4 - core index']
  #allocation1 [shape = 'u32[72,128]{1,0:T(1,128)}', space=vmem, size = 0x9000, scoped, tag = 'internal scratch']
  #allocation2 [shape = 'f32[8,16]{1,0:T(8,128)}', space=vmem, size = 0x1000, scoped, tag = 'scratch operand']
  %s0 = inlined_call_operand.vmem [shape: s32[1,16], index: 0, kind: input, shape index: {}]
  %s1 = inlined_call_operand.vmem [shape: f32[1,16], index: 1, kind: input, shape index: {}]
  %s2 = inlined_call_operand.vmem [shape: f32[1,16], index: 2, kind: input, shape index: {}]
  %s3 = inlined_call_operand.vmem [shape: f32[1,16], index: 3, kind: input, shape index: {}]
  %s4 = inlined_call_operand.vmem [shape: f32[1,16], index: 4, kind: input, shape index: {}]
  %s5 = inlined_call_operand.vmem [shape: f32[32,16], index: 5, kind: input, shape index: {}]
  %s6 = inlined_call_operand.vmem [shape: f32[256,32], index: 6, kind: input, shape index: {}]
  %s7 = inlined_call_operand.vmem [shape: f32[256,1], index: 7, kind: input, shape index: {}]
  %s8 = inlined_call_operand.hbm [shape: f32[4,16], index: 8, kind: output, shape index: {}]
  %s9 = sld [smem:[#allocation0]]
  $region50: #{tpu_custom_call.1} parent=0
    _
  %s11 = ssub.s32 1, %s9
  %s12 = scalar_select 0, %s11, %s9
  $region1: #{tpu_custom_call.1} parent=0
    #allocation3 [shape = 'u8[2048]{0}', space=vmem, size = 0x800, scoped, tag = 'output window, operand 0, single buffered']
    #allocation4 [shape = 's32[1]{0}', space=sflag, size = 0x4, scoped, tag = 'scoped memory for tpu_custom_call.1']
    %13 = vsyncpa [#allocation4], 0
    // Predicated region
    $region2: #{tpu_custom_call.1} parent=1 // pred_check
      _
    $region3: #{tpu_custom_call.1} parent=1 // pred_check_branch
      %15 = sbr.rel (0) target = $region5
    $region4: #{tpu_custom_call.1} parent=1 // pred_region
      _
    $region5: #{tpu_custom_call.1} parent=1 // pred_fallthru
      _
    // Predicated region
    $region6: #{tpu_custom_call.1} parent=1 // pred_check
      _
    $region7: #{tpu_custom_call.1} parent=1 // pred_check_branch
      %17 = sbr.rel (0) target = $region9
    $region8: #{tpu_custom_call.1} parent=1 // pred_region
      _
    $region9: #{tpu_custom_call.1} parent=1 // pred_fallthru
      _
    // Predicated region
    $region10: #{tpu_custom_call.1} parent=1 // pred_check
      _
    $region11: #{tpu_custom_call.1} parent=1 // pred_check_branch
      %19 = sbr.rel (0) target = $region13
    $region12: #{tpu_custom_call.1} parent=1 // pred_region
      _
    $region13: #{tpu_custom_call.1} parent=1 // pred_fallthru
      _
    // Predicated region
    $region14: #{tpu_custom_call.1} parent=1 // pred_check
      _
    $region15: #{tpu_custom_call.1} parent=1 // pred_check_branch
      %21 = sbr.rel (0) target = $region17
    $region16: #{tpu_custom_call.1} parent=1 // pred_region
      _
    $region17: #{tpu_custom_call.1} parent=1 // pred_fallthru
      _
    // Predicated region
    $region18: #{tpu_custom_call.1} parent=1 // pred_check
      _
    $region19: #{tpu_custom_call.1} parent=1 // pred_check_branch
      %23 = sbr.rel (0) target = $region21
    $region20: #{tpu_custom_call.1} parent=1 // pred_region
      _
    $region21: #{tpu_custom_call.1} parent=1 // pred_fallthru
      _
    // Predicated region
    $region22: #{tpu_custom_call.1} parent=1 // pred_check
      _
    $region23: #{tpu_custom_call.1} parent=1 // pred_check_branch
      %25 = sbr.rel (0) target = $region25
    $region24: #{tpu_custom_call.1} parent=1 // pred_region
      _
    $region25: #{tpu_custom_call.1} parent=1 // pred_fallthru
      _
    // Predicated region
    $region26: #{tpu_custom_call.1} parent=1 // pred_check
      _
    $region27: #{tpu_custom_call.1} parent=1 // pred_check_branch
      %27 = sbr.rel (0) target = $region29
    $region28: #{tpu_custom_call.1} parent=1 // pred_region
      _
    $region29: #{tpu_custom_call.1} parent=1 // pred_fallthru
      _
    // Predicated region
    $region30: #{tpu_custom_call.1} parent=1 // pred_check
      _
    $region31: #{tpu_custom_call.1} parent=1 // pred_check_branch
      %29 = sbr.rel (0) target = $region33
    $region32: #{tpu_custom_call.1} parent=1 // pred_region
      _
    $region33: #{tpu_custom_call.1} parent=1 // pred_fallthru
      _
    %p30 = scmp.eq.s32.totalorder 0, 0
    // Predicated region
    $region34: #{tpu_custom_call.1} parent=1 // pred_check
      %p31 = pneg %p30
    $region35: #{tpu_custom_call.1} parent=1 // pred_check_branch
      %33 = sbr.rel (%p31) target = $region37
    $region36: #{tpu_custom_call.1} parent=1 // pred_region
      %vm34 = vcmask 130048
      %35 = vst.msk [vmem:[#allocation2] sm:$0xff] %vm34, 0.0
      %vm36 = vcmask 122880
      %37 = vst.msk [vmem:[#allocation2] sm:$0x1] %vm36, -inf
    $region37: #{tpu_custom_call.1} parent=1 // pred_fallthru
      _
    %v38 = vld [vmem:[%s6] sm:$0xff]
    %v39 = vld [vmem:[%s6 + $0x8] sm:$0xff]
    %v40 = vld [vmem:[%s6 + $0x10] sm:$0xff]
    %v41 = vld [vmem:[%s6 + $0x18] sm:$0xff]
    %v42 = vld [vmem:[%s6 + $0x20] sm:$0xff]
    %v43 = vld [vmem:[%s6 + $0x28] sm:$0xff]
    %v44 = vld [vmem:[%s6 + $0x30] sm:$0xff]
    %v45 = vld [vmem:[%s6 + $0x38] sm:$0xff]
    %v46 = vld [vmem:[%s6 + $0x40] sm:$0xff]
    %v47 = vld [vmem:[%s6 + $0x48] sm:$0xff]
    %v48 = vld [vmem:[%s6 + $0x50] sm:$0xff]
    %v49 = vld [vmem:[%s6 + $0x58] sm:$0xff]
    %v50 = vld [vmem:[%s6 + $0x60] sm:$0xff]
    %v51 = vld [vmem:[%s6 + $0x68] sm:$0xff]
    %v52 = vld [vmem:[%s6 + $0x70] sm:$0xff]
    %v53 = vld [vmem:[%s6 + $0x78] sm:$0xff]
    %v54 = vld [vmem:[%s6 + $0x80] sm:$0xff]
    %v55 = vld [vmem:[%s6 + $0x88] sm:$0xff]
    %v56 = vld [vmem:[%s6 + $0x90] sm:$0xff]
    %v57 = vld [vmem:[%s6 + $0x98] sm:$0xff]
    %v58 = vld [vmem:[%s6 + $0xa0] sm:$0xff]
    %v59 = vld [vmem:[%s6 + $0xa8] sm:$0xff]
    %v60 = vld [vmem:[%s6 + $0xb0] sm:$0xff]
    %v61 = vld [vmem:[%s6 + $0xb8] sm:$0xff]
    %v62 = vld [vmem:[%s6 + $0xc0] sm:$0xff]
    %v63 = vld [vmem:[%s6 + $0xc8] sm:$0xff]
    %v64 = vld [vmem:[%s6 + $0xd0] sm:$0xff]
    %v65 = vld [vmem:[%s6 + $0xd8] sm:$0xff]
    %v66 = vld [vmem:[%s6 + $0xe0] sm:$0xff]
    %v67 = vld [vmem:[%s6 + $0xe8] sm:$0xff]
    %v68 = vld [vmem:[%s6 + $0xf0] sm:$0xff]
    %v69 = vld [vmem:[%s6 + $0xf8] sm:$0xff]
    %v70 = vld [vmem:[%s5] sm:$0xff]
    %v71 = vld [vmem:[%s5 + $0x8] sm:$0xff]
    %v72 = vld [vmem:[%s5 + $0x10] sm:$0xff]
    %v73 = vld [vmem:[%s5 + $0x18] sm:$0xff]
    %v74 = vld [vmem:[%s7] sm:$0xff]
    %v75 = vld [vmem:[%s7 + $0x8] sm:$0xff]
    %v76 = vld [vmem:[%s7 + $0x10] sm:$0xff]
    %v77 = vld [vmem:[%s7 + $0x18] sm:$0xff]
    %v78 = vld [vmem:[%s7 + $0x20] sm:$0xff]
    %v79 = vld [vmem:[%s7 + $0x28] sm:$0xff]
    %v80 = vld [vmem:[%s7 + $0x30] sm:$0xff]
    %v81 = vld [vmem:[%s7 + $0x38] sm:$0xff]
    %v82 = vld [vmem:[%s7 + $0x40] sm:$0xff]
    %v83 = vld [vmem:[%s7 + $0x48] sm:$0xff]
    %v84 = vld [vmem:[%s7 + $0x50] sm:$0xff]
    %v85 = vld [vmem:[%s7 + $0x58] sm:$0xff]
    %v86 = vld [vmem:[%s7 + $0x60] sm:$0xff]
    %v87 = vld [vmem:[%s7 + $0x68] sm:$0xff]
    %v88 = vld [vmem:[%s7 + $0x70] sm:$0xff]
    %v89 = vld [vmem:[%s7 + $0x78] sm:$0xff]
    %v90 = vld [vmem:[%s7 + $0x80] sm:$0xff]
    %v91 = vld [vmem:[%s7 + $0x88] sm:$0xff]
    %v92 = vld [vmem:[%s7 + $0x90] sm:$0xff]
    %v93 = vld [vmem:[%s7 + $0x98] sm:$0xff]
    %v94 = vld [vmem:[%s7 + $0xa0] sm:$0xff]
    %v95 = vld [vmem:[%s7 + $0xa8] sm:$0xff]
    %v96 = vld [vmem:[%s7 + $0xb0] sm:$0xff]
    %v97 = vld [vmem:[%s7 + $0xb8] sm:$0xff]
    %v98 = vld [vmem:[%s7 + $0xc0] sm:$0xff]
    %v99 = vld [vmem:[%s7 + $0xc8] sm:$0xff]
    %v100 = vld [vmem:[%s7 + $0xd0] sm:$0xff]
    %v101 = vld [vmem:[%s7 + $0xd8] sm:$0xff]
    %v102 = vld [vmem:[%s7 + $0xe0] sm:$0xff]
    %v103 = vld [vmem:[%s7 + $0xe8] sm:$0xff]
    %v104 = vld [vmem:[%s7 + $0xf0] sm:$0xff]
    %v105 = vld [vmem:[%s7 + $0xf8] sm:$0xff]
    %107 = vset.pattern.permute.xlu0 0
    %108 = vperm.xlu0 %107, %v74
    %v109 = vpop.permute.xlu0 %108
    %112 = vset.pattern.permute.xlu0 0
    %113 = vperm.xlu0 %112, %v75
    %v114 = vpop.permute.xlu0 %113
    %117 = vset.pattern.permute.xlu0 0
    %118 = vperm.xlu0 %117, %v76
    %v119 = vpop.permute.xlu0 %118
    %122 = vset.pattern.permute.xlu0 0
    %123 = vperm.xlu0 %122, %v77
    %v124 = vpop.permute.xlu0 %123
    %127 = vset.pattern.permute.xlu0 0
    %128 = vperm.xlu0 %127, %v78
    %v129 = vpop.permute.xlu0 %128
    %132 = vset.pattern.permute.xlu0 0
    %133 = vperm.xlu0 %132, %v79
    %v134 = vpop.permute.xlu0 %133
    %137 = vset.pattern.permute.xlu0 0
    %138 = vperm.xlu0 %137, %v80
    %v139 = vpop.permute.xlu0 %138
    %142 = vset.pattern.permute.xlu0 0
    %143 = vperm.xlu0 %142, %v81
    %v144 = vpop.permute.xlu0 %143
    %147 = vset.pattern.permute.xlu0 0
    %148 = vperm.xlu0 %147, %v82
    %v149 = vpop.permute.xlu0 %148
    %152 = vset.pattern.permute.xlu0 0
    %153 = vperm.xlu0 %152, %v83
    %v154 = vpop.permute.xlu0 %153
    %157 = vset.pattern.permute.xlu0 0
    %158 = vperm.xlu0 %157, %v84
    %v159 = vpop.permute.xlu0 %158
    %162 = vset.pattern.permute.xlu0 0
    %163 = vperm.xlu0 %162, %v85
    %v164 = vpop.permute.xlu0 %163
    %167 = vset.pattern.permute.xlu0 0
    %168 = vperm.xlu0 %167, %v86
    %v169 = vpop.permute.xlu0 %168
    %172 = vset.pattern.permute.xlu0 0
    %173 = vperm.xlu0 %172, %v87
    %v174 = vpop.permute.xlu0 %173
    %177 = vset.pattern.permute.xlu0 0
    %178 = vperm.xlu0 %177, %v88
    %v179 = vpop.permute.xlu0 %178
    %182 = vset.pattern.permute.xlu0 0
    %183 = vperm.xlu0 %182, %v89
    %v184 = vpop.permute.xlu0 %183
    %187 = vset.pattern.permute.xlu0 0
    %188 = vperm.xlu0 %187, %v90
    %v189 = vpop.permute.xlu0 %188
    %192 = vset.pattern.permute.xlu0 0
    %193 = vperm.xlu0 %192, %v91
    %v194 = vpop.permute.xlu0 %193
    %197 = vset.pattern.permute.xlu0 0
    %198 = vperm.xlu0 %197, %v92
    %v199 = vpop.permute.xlu0 %198
    %202 = vset.pattern.permute.xlu0 0
    %203 = vperm.xlu0 %202, %v93
    %v204 = vpop.permute.xlu0 %203
    %207 = vset.pattern.permute.xlu0 0
    %208 = vperm.xlu0 %207, %v94
    %v209 = vpop.permute.xlu0 %208
    %212 = vset.pattern.permute.xlu0 0
    %213 = vperm.xlu0 %212, %v95
    %v214 = vpop.permute.xlu0 %213
    %217 = vset.pattern.permute.xlu0 0
    %218 = vperm.xlu0 %217, %v96
    %v219 = vpop.permute.xlu0 %218
    %222 = vset.pattern.permute.xlu0 0
    %223 = vperm.xlu0 %222, %v97
    %v224 = vpop.permute.xlu0 %223
    %227 = vset.pattern.permute.xlu0 0
    %228 = vperm.xlu0 %227, %v98
    %v229 = vpop.permute.xlu0 %228
    %232 = vset.pattern.permute.xlu0 0
    %233 = vperm.xlu0 %232, %v99
    %v234 = vpop.permute.xlu0 %233
    %237 = vset.pattern.permute.xlu0 0
    %238 = vperm.xlu0 %237, %v100
    %v239 = vpop.permute.xlu0 %238
    %242 = vset.pattern.permute.xlu0 0
    %243 = vperm.xlu0 %242, %v101
    %v244 = vpop.permute.xlu0 %243
    %247 = vset.pattern.permute.xlu0 0
    %248 = vperm.xlu0 %247, %v102
    %v249 = vpop.permute.xlu0 %248
    %252 = vset.pattern.permute.xlu0 0
    %253 = vperm.xlu0 %252, %v103
    %v254 = vpop.permute.xlu0 %253
    %257 = vset.pattern.permute.xlu0 0
    %258 = vperm.xlu0 %257, %v104
    %v259 = vpop.permute.xlu0 %258
    %262 = vset.pattern.permute.xlu0 0
    %263 = vperm.xlu0 %262, %v105
    %v264 = vpop.permute.xlu0 %263
    %vm266 = vcmask 261120
    %v268 = vsel %vm266, %v38, 0
    %v271 = vsel %vm266, %v39, 0
    %v274 = vsel %vm266, %v40, 0
    %v277 = vsel %vm266, %v41, 0
    %v280 = vsel %vm266, %v42, 0
    %v283 = vsel %vm266, %v43, 0
    %v286 = vsel %vm266, %v44, 0
    %v289 = vsel %vm266, %v45, 0
    %v292 = vsel %vm266, %v46, 0
    %v295 = vsel %vm266, %v47, 0
    %v298 = vsel %vm266, %v48, 0
    %v301 = vsel %vm266, %v49, 0
    %v304 = vsel %vm266, %v50, 0
    %v307 = vsel %vm266, %v51, 0
    %v310 = vsel %vm266, %v52, 0
    %v313 = vsel %vm266, %v53, 0
    %v316 = vsel %vm266, %v54, 0
    %v319 = vsel %vm266, %v55, 0
    %v322 = vsel %vm266, %v56, 0
    %v325 = vsel %vm266, %v57, 0
    %v328 = vsel %vm266, %v58, 0
    %v331 = vsel %vm266, %v59, 0
    %v334 = vsel %vm266, %v60, 0
    %v337 = vsel %vm266, %v61, 0
    %v340 = vsel %vm266, %v62, 0
    %v343 = vsel %vm266, %v63, 0
    %v346 = vsel %vm266, %v64, 0
    %v349 = vsel %vm266, %v65, 0
    %v352 = vsel %vm266, %v66, 0
    %v355 = vsel %vm266, %v67, 0
    %v358 = vsel %vm266, %v68, 0
    %v361 = vsel %vm266, %v69, 0
    %363 = vmatpush.msra.mxu0 0.0
    %364 = vmatpush.msra.mxu0 0.0
    %365 = vmatpush.msra.mxu0 0.0
    %366 = vmatpush.msra.mxu0 0.0
    %367 = vmatpush.msra.mxu0 0.0
    %368 = vmatpush.msra.mxu0 0.0
    %369 = vmatpush.msra.mxu0 0.0
    %370 = vmatpush.msra.mxu0 0.0
    %371 = vmatpush.msra.mxu0 0.0
    %372 = vmatpush.msra.mxu0 0.0
    %373 = vmatpush.msra.mxu0 0.0
    %374 = vmatpush.msra.mxu0 0.0
    %375 = vmatpush.msra.mxu0 %v73
    %376 = vmatpush.msra.mxu0 %v72
    %377 = vmatpush.msra.mxu0 %v71
    %378 = vmatpush.msra.mxu0 %v70
    %379 = vmatmul.f32.gmra.mxu0 %v268
    %v380 = vpop.f32.mrf.mxu0
    %v381 = vadd.f32 %v109, %v380
    %382 = vmatmul.f32.gmra.mxu0 %v271
    %v383 = vpop.f32.mrf.mxu0
    %v384 = vadd.f32 %v114, %v383
    %385 = vmatmul.f32.gmra.mxu0 %v274
    %v386 = vpop.f32.mrf.mxu0
    %v387 = vadd.f32 %v119, %v386
    %388 = vmatmul.f32.gmra.mxu0 %v277
    %v389 = vpop.f32.mrf.mxu0
    %v390 = vadd.f32 %v124, %v389
    %391 = vmatmul.f32.gmra.mxu0 %v280
    %v392 = vpop.f32.mrf.mxu0
    %v393 = vadd.f32 %v129, %v392
    %394 = vmatmul.f32.gmra.mxu0 %v283
    %v395 = vpop.f32.mrf.mxu0
    %v396 = vadd.f32 %v134, %v395
    %397 = vmatmul.f32.gmra.mxu0 %v286
    %v398 = vpop.f32.mrf.mxu0
    %v399 = vadd.f32 %v139, %v398
    %400 = vmatmul.f32.gmra.mxu0 %v289
    %v401 = vpop.f32.mrf.mxu0
    %v402 = vadd.f32 %v144, %v401
    %403 = vmatmul.f32.gmra.mxu0 %v292
    %v404 = vpop.f32.mrf.mxu0
    %v405 = vadd.f32 %v149, %v404
    %406 = vmatmul.f32.gmra.mxu0 %v295
    %v407 = vpop.f32.mrf.mxu0
    %v408 = vadd.f32 %v154, %v407
    %409 = vmatmul.f32.gmra.mxu0 %v298
    %v410 = vpop.f32.mrf.mxu0
    %v411 = vadd.f32 %v159, %v410
    %412 = vmatmul.f32.gmra.mxu0 %v301
    %v413 = vpop.f32.mrf.mxu0
    %v414 = vadd.f32 %v164, %v413
    %415 = vmatmul.f32.gmra.mxu0 %v304
    %v416 = vpop.f32.mrf.mxu0
    %v417 = vadd.f32 %v169, %v416
    %418 = vmatmul.f32.gmra.mxu0 %v307
    %v419 = vpop.f32.mrf.mxu0
    %v420 = vadd.f32 %v174, %v419
    %421 = vmatmul.f32.gmra.mxu0 %v310
    %v422 = vpop.f32.mrf.mxu0
    %v423 = vadd.f32 %v179, %v422
    %424 = vmatmul.f32.gmra.mxu0 %v313
    %v425 = vpop.f32.mrf.mxu0
    %v426 = vadd.f32 %v184, %v425
    %427 = vmatmul.f32.gmra.mxu0 %v316
    %v428 = vpop.f32.mrf.mxu0
    %v429 = vadd.f32 %v189, %v428
    %430 = vmatmul.f32.gmra.mxu0 %v319
    %v431 = vpop.f32.mrf.mxu0
    %v432 = vadd.f32 %v194, %v431
    %433 = vmatmul.f32.gmra.mxu0 %v322
    %v434 = vpop.f32.mrf.mxu0
    %v435 = vadd.f32 %v199, %v434
    %436 = vmatmul.f32.gmra.mxu0 %v325
    %v437 = vpop.f32.mrf.mxu0
    %v438 = vadd.f32 %v204, %v437
    %439 = vmatmul.f32.gmra.mxu0 %v328
    %v440 = vpop.f32.mrf.mxu0
    %v441 = vadd.f32 %v209, %v440
    %442 = vmatmul.f32.gmra.mxu0 %v331
    %v443 = vpop.f32.mrf.mxu0
    %v444 = vadd.f32 %v214, %v443
    %445 = vmatmul.f32.gmra.mxu0 %v334
    %v446 = vpop.f32.mrf.mxu0
    %v447 = vadd.f32 %v219, %v446
    %448 = vmatmul.f32.gmra.mxu0 %v337
    %v449 = vpop.f32.mrf.mxu0
    %v450 = vadd.f32 %v224, %v449
    %451 = vmatmul.f32.gmra.mxu0 %v340
    %v452 = vpop.f32.mrf.mxu0
    %v453 = vadd.f32 %v229, %v452
    %454 = vmatmul.f32.gmra.mxu0 %v343
    %v455 = vpop.f32.mrf.mxu0
    %v456 = vadd.f32 %v234, %v455
    %457 = vmatmul.f32.gmra.mxu0 %v346
    %v458 = vpop.f32.mrf.mxu0
    %v459 = vadd.f32 %v239, %v458
    %460 = vmatmul.f32.gmra.mxu0 %v349
    %v461 = vpop.f32.mrf.mxu0
    %v462 = vadd.f32 %v244, %v461
    %463 = vmatmul.f32.gmra.mxu0 %v352
    %v464 = vpop.f32.mrf.mxu0
    %v465 = vadd.f32 %v249, %v464
    %466 = vmatmul.f32.gmra.mxu0 %v355
    %v467 = vpop.f32.mrf.mxu0
    %v468 = vadd.f32 %v254, %v467
    %469 = vmatmul.f32.gmra.mxu0 %v358
    %v470 = vpop.f32.mrf.mxu0
    %v471 = vadd.f32 %v259, %v470
    %472 = vmatmul.f32.gmra.mxu0 %v361
    %v473 = vpop.f32.mrf.mxu0
    %v474 = vadd.f32 %v264, %v473
    %475 = vdwg.mxu0
    %s476 = smul.u32 0, 256
    %v477 = vlaneseq
    %v478 = vshrl.u32 %v477, 7
    %v479 = vadd.s32 %v478, 8
    %v480 = vadd.s32 %v478, 16
    %v481 = vadd.s32 %v478, 24
    %v482 = vadd.s32 %v478, 32
    %v483 = vadd.s32 %v478, 40
    %v484 = vadd.s32 %v478, 48
    %v485 = vadd.s32 %v478, 56
    %v486 = vadd.s32 %v478, 64
    %v487 = vadd.s32 %v478, 72
    %v488 = vadd.s32 %v478, 80
    %v489 = vadd.s32 %v478, 88
    %v490 = vadd.s32 %v478, 96
    %v491 = vadd.s32 %v478, 104
    %v492 = vadd.s32 %v478, 112
    %v493 = vadd.s32 %v478, 120
    %v494 = vadd.s32 %v478, 128
    %v495 = vadd.s32 %v478, 136
    %v496 = vadd.s32 %v478, 144
    %v497 = vadd.s32 %v478, 152
    %v498 = vadd.s32 %v478, 160
    %v499 = vadd.s32 %v478, 168
    %v500 = vadd.s32 %v478, 176
    %v501 = vadd.s32 %v478, 184
    %v502 = vadd.s32 %v478, 192
    %v503 = vadd.s32 %v478, 200
    %v504 = vadd.s32 %v478, 208
    %v505 = vadd.s32 %v478, 216
    %v506 = vadd.s32 %v478, 224
    %v507 = vadd.s32 %v478, 232
    %v508 = vadd.s32 %v478, 240
    %v509 = vadd.s32 %v478, 248
    %v510 = vstv %s476
    %v511 = vadd.s32 %v510, %v478
    %v512 = vadd.s32 %v510, %v479
    %v513 = vadd.s32 %v510, %v480
    %v514 = vadd.s32 %v510, %v481
    %v515 = vadd.s32 %v510, %v482
    %v516 = vadd.s32 %v510, %v483
    %v517 = vadd.s32 %v510, %v484
    %v518 = vadd.s32 %v510, %v485
    %v519 = vadd.s32 %v510, %v486
    %v520 = vadd.s32 %v510, %v487
    %v521 = vadd.s32 %v510, %v488
    %v522 = vadd.s32 %v510, %v489
    %v523 = vadd.s32 %v510, %v490
    %v524 = vadd.s32 %v510, %v491
    %v525 = vadd.s32 %v510, %v492
    %v526 = vadd.s32 %v510, %v493
    %v527 = vadd.s32 %v510, %v494
    %v528 = vadd.s32 %v510, %v495
    %v529 = vadd.s32 %v510, %v496
    %v530 = vadd.s32 %v510, %v497
    %v531 = vadd.s32 %v510, %v498
    %v532 = vadd.s32 %v510, %v499
    %v533 = vadd.s32 %v510, %v500
    %v534 = vadd.s32 %v510, %v501
    %v535 = vadd.s32 %v510, %v502
    %v536 = vadd.s32 %v510, %v503
    %v537 = vadd.s32 %v510, %v504
    %v538 = vadd.s32 %v510, %v505
    %v539 = vadd.s32 %v510, %v506
    %v540 = vadd.s32 %v510, %v507
    %v541 = vadd.s32 %v510, %v508
    %v542 = vadd.s32 %v510, %v509
    %v543 = vld [vmem:[%s0] sm:$0x1]
    %v544 = vperm.slane %v543, 0
    %vm545 = vcmp.eq.s32.totalorder %v511, %v544
    %vm546 = vcmp.eq.s32.totalorder %v512, %v544
    %vm547 = vcmp.eq.s32.totalorder %v513, %v544
    %vm548 = vcmp.eq.s32.totalorder %v514, %v544
    %vm549 = vcmp.eq.s32.totalorder %v515, %v544
    %vm550 = vcmp.eq.s32.totalorder %v516, %v544
    %vm551 = vcmp.eq.s32.totalorder %v517, %v544
    %vm552 = vcmp.eq.s32.totalorder %v518, %v544
    %vm553 = vcmp.eq.s32.totalorder %v519, %v544
    %vm554 = vcmp.eq.s32.totalorder %v520, %v544
    %vm555 = vcmp.eq.s32.totalorder %v521, %v544
    %vm556 = vcmp.eq.s32.totalorder %v522, %v544
    %vm557 = vcmp.eq.s32.totalorder %v523, %v544
    %vm558 = vcmp.eq.s32.totalorder %v524, %v544
    %vm559 = vcmp.eq.s32.totalorder %v525, %v544
    %vm560 = vcmp.eq.s32.totalorder %v526, %v544
    %vm561 = vcmp.eq.s32.totalorder %v527, %v544
    %vm562 = vcmp.eq.s32.totalorder %v528, %v544
    %vm563 = vcmp.eq.s32.totalorder %v529, %v544
    %vm564 = vcmp.eq.s32.totalorder %v530, %v544
    %vm565 = vcmp.eq.s32.totalorder %v531, %v544
    %vm566 = vcmp.eq.s32.totalorder %v532, %v544
    %vm567 = vcmp.eq.s32.totalorder %v533, %v544
    %vm568 = vcmp.eq.s32.totalorder %v534, %v544
    %vm569 = vcmp.eq.s32.totalorder %v535, %v544
    %vm570 = vcmp.eq.s32.totalorder %v536, %v544
    %vm571 = vcmp.eq.s32.totalorder %v537, %v544
    %vm572 = vcmp.eq.s32.totalorder %v538, %v544
    %vm573 = vcmp.eq.s32.totalorder %v539, %v544
    %vm574 = vcmp.eq.s32.totalorder %v540, %v544
    %vm575 = vcmp.eq.s32.totalorder %v541, %v544
    %vm576 = vcmp.eq.s32.totalorder %v542, %v544
    %v577 = vld [vmem:[#allocation2] sm:$0x1]
    %vm578 = vcmask 130048
    %v579 = vsel %vm578, %v381, -inf
    %v580 = vsel %vm578, %v384, -inf
    %v581 = vsel %vm578, %v387, -inf
    %v582 = vsel %vm578, %v390, -inf
    %v583 = vsel %vm578, %v393, -inf
    %v584 = vmax.f32 %v579, %v583
    %v585 = vsel %vm578, %v396, -inf
    %v586 = vmax.f32 %v580, %v585
    %v587 = vsel %vm578, %v399, -inf
    %v588 = vmax.f32 %v581, %v587
    %v589 = vsel %vm578, %v402, -inf
    %v590 = vmax.f32 %v582, %v589
    %v591 = vsel %vm578, %v405, -inf
    %v592 = vmax.f32 %v584, %v591
    %v593 = vsel %vm578, %v408, -inf
    %v594 = vmax.f32 %v586, %v593
    %v595 = vsel %vm578, %v411, -inf
    %v596 = vmax.f32 %v588, %v595
    %v597 = vsel %vm578, %v414, -inf
    %v598 = vmax.f32 %v590, %v597
    %v599 = vsel %vm578, %v417, -inf
    %v600 = vmax.f32 %v592, %v599
    %v601 = vsel %vm578, %v420, -inf
    %v602 = vmax.f32 %v594, %v601
    %v603 = vsel %vm578, %v423, -inf
    %v604 = vmax.f32 %v596, %v603
    %v605 = vsel %vm578, %v426, -inf
    %v606 = vmax.f32 %v598, %v605
    %v607 = vsel %vm578, %v429, -inf
    %v608 = vmax.f32 %v600, %v607
    %v609 = vsel %vm578, %v432, -inf
    %v610 = vmax.f32 %v602, %v609
    %v611 = vsel %vm578, %v435, -inf
    %v612 = vmax.f32 %v604, %v611
    %v613 = vsel %vm578, %v438, -inf
    %v614 = vmax.f32 %v606, %v613
    %v615 = vsel %vm578, %v441, -inf
    %v616 = vmax.f32 %v608, %v615
    %v617 = vsel %vm578, %v444, -inf
    %v618 = vmax.f32 %v610, %v617
    %v619 = vsel %vm578, %v447, -inf
    %v620 = vmax.f32 %v612, %v619
    %v621 = vsel %vm578, %v450, -inf
    %v622 = vmax.f32 %v614, %v621
    %v623 = vsel %vm578, %v453, -inf
    %v624 = vmax.f32 %v616, %v623
    %v625 = vsel %vm578, %v456, -inf
    %v626 = vmax.f32 %v618, %v625
    %v627 = vsel %vm578, %v459, -inf
    %v628 = vmax.f32 %v620, %v627
    %v629 = vsel %vm578, %v462, -inf
    %v630 = vmax.f32 %v622, %v629
    %v631 = vsel %vm578, %v465, -inf
    %v632 = vmax.f32 %v624, %v631
    %v633 = vsel %vm578, %v468, -inf
    %v634 = vmax.f32 %v626, %v633
    %v635 = vsel %vm578, %v471, -inf
    %v636 = vmax.f32 %v628, %v635
    %v637 = vsel %vm578, %v474, -inf
    %v638 = vmax.f32 %v630, %v637
    %v639 = vmax.f32 %v632, %v634
    %v640 = vmax.f32 %v636, %v638
    %v641 = vmax.f32 %v639, %v640
    %v642 = vrot.slane %v641, 4
    %v643 = vmax.f32 %v641, %v642
    %v644 = vrot.slane %v643, 2
    %v645 = vmax.f32 %v643, %v644
    %v646 = vrot.slane %v645, 1
    %v647 = vmax.f32 %v645, %v646
    %v648 = vmax.f32 %v577, %v647
    %v649 = vld [vmem:[#allocation2 + $0x1] sm:$0x1]
    %v650 = vsub.f32 %v577, %v648
    %v651 = vmul.f32 %v650, 1.442695
    %v652 = vpow.pop %v651
    %v653 = vmul.f32 %v649, %v652
    %v654 = vperm.slane %v648, 0
    %v655 = vsub.f32 %v381, %v654
    %v656 = vsub.f32 %v384, %v654
    %v657 = vsub.f32 %v387, %v654
    %v658 = vsub.f32 %v390, %v654
    %v659 = vsub.f32 %v393, %v654
    %v660 = vsub.f32 %v396, %v654
    %v661 = vsub.f32 %v399, %v654
    %v662 = vsub.f32 %v402, %v654
    %v663 = vsub.f32 %v405, %v654
    %v664 = vsub.f32 %v408, %v654
    %v665 = vsub.f32 %v411, %v654
    %v666 = vsub.f32 %v414, %v654
    %v667 = vsub.f32 %v417, %v654
    %v668 = vsub.f32 %v420, %v654
    %v669 = vsub.f32 %v423, %v654
    %v670 = vsub.f32 %v426, %v654
    %v671 = vsub.f32 %v429, %v654
    %v672 = vsub.f32 %v432, %v654
    %v673 = vsub.f32 %v435, %v654
    %v674 = vsub.f32 %v438, %v654
    %v675 = vsub.f32 %v441, %v654
    %v676 = vsub.f32 %v444, %v654
    %v677 = vsub.f32 %v447, %v654
    %v678 = vsub.f32 %v450, %v654
    %v679 = vsub.f32 %v453, %v654
    %v680 = vsub.f32 %v456, %v654
    %v681 = vsub.f32 %v459, %v654
    %v682 = vsub.f32 %v462, %v654
    %v683 = vsub.f32 %v465, %v654
    %v684 = vsub.f32 %v468, %v654
    %v685 = vsub.f32 %v471, %v654
    %v686 = vsub.f32 %v474, %v654
    %v687 = vmul.f32 %v655, 1.442695
    %v688 = vpow.pop %v687
    %v689 = vmul.f32 %v656, 1.442695
    %v690 = vpow.pop %v689
    %v691 = vmul.f32 %v657, 1.442695
    %v692 = vpow.pop %v691
    %v693 = vmul.f32 %v658, 1.442695
    %v694 = vpow.pop %v693
    %v695 = vmul.f32 %v659, 1.442695
    %v696 = vpow.pop %v695
    %v697 = vmul.f32 %v660, 1.442695
    %v698 = vpow.pop %v697
    %v699 = vmul.f32 %v661, 1.442695
    %v700 = vpow.pop %v699
    %v701 = vmul.f32 %v662, 1.442695
    %v702 = vpow.pop %v701
    %v703 = vmul.f32 %v663, 1.442695
    %v704 = vpow.pop %v703
    %v705 = vmul.f32 %v664, 1.442695
    %v706 = vpow.pop %v705
    %v707 = vmul.f32 %v665, 1.442695
    %v708 = vpow.pop %v707
    %v709 = vmul.f32 %v666, 1.442695
    %v710 = vpow.pop %v709
    %v711 = vmul.f32 %v667, 1.442695
    %v712 = vpow.pop %v711
    %v713 = vmul.f32 %v668, 1.442695
    %v714 = vpow.pop %v713
    %v715 = vmul.f32 %v669, 1.442695
    %v716 = vpow.pop %v715
    %v717 = vmul.f32 %v670, 1.442695
    %v718 = vpow.pop %v717
    %v719 = vmul.f32 %v671, 1.442695
    %v720 = vpow.pop %v719
    %v721 = vmul.f32 %v672, 1.442695
    %v722 = vpow.pop %v721
    %v723 = vmul.f32 %v673, 1.442695
    %v724 = vpow.pop %v723
    %v725 = vmul.f32 %v674, 1.442695
    %v726 = vpow.pop %v725
    %v727 = vmul.f32 %v675, 1.442695
    %v728 = vpow.pop %v727
    %v729 = vmul.f32 %v676, 1.442695
    %v730 = vpow.pop %v729
    %v731 = vmul.f32 %v677, 1.442695
    %v732 = vpow.pop %v731
    %v733 = vmul.f32 %v678, 1.442695
    %v734 = vpow.pop %v733
    %v735 = vmul.f32 %v679, 1.442695
    %v736 = vpow.pop %v735
    %v737 = vmul.f32 %v680, 1.442695
    %v738 = vpow.pop %v737
    %v739 = vmul.f32 %v681, 1.442695
    %v740 = vpow.pop %v739
    %v741 = vmul.f32 %v682, 1.442695
    %v742 = vpow.pop %v741
    %v743 = vmul.f32 %v683, 1.442695
    %v744 = vpow.pop %v743
    %v745 = vmul.f32 %v684, 1.442695
    %v746 = vpow.pop %v745
    %v747 = vmul.f32 %v685, 1.442695
    %v748 = vpow.pop %v747
    %v749 = vmul.f32 %v686, 1.442695
    %v750 = vpow.pop %v749
    %v751 = vsel %vm578, %v688, 0.0
    %v752 = vsel %vm578, %v690, 0.0
    %v753 = vadd.f32 %v751, %v752
    %v754 = vsel %vm578, %v692, 0.0
    %v755 = vadd.f32 %v753, %v754
    %v756 = vsel %vm578, %v694, 0.0
    %v757 = vadd.f32 %v755, %v756
    %v758 = vsel %vm578, %v696, 0.0
    %v759 = vadd.f32 %v757, %v758
    %v760 = vsel %vm578, %v698, 0.0
    %v761 = vadd.f32 %v759, %v760
    %v762 = vsel %vm578, %v700, 0.0
    %v763 = vadd.f32 %v761, %v762
    %v764 = vsel %vm578, %v702, 0.0
    %v765 = vadd.f32 %v763, %v764
    %v766 = vsel %vm578, %v704, 0.0
    %v767 = vadd.f32 %v765, %v766
    %v768 = vsel %vm578, %v706, 0.0
    %v769 = vadd.f32 %v767, %v768
    %v770 = vsel %vm578, %v708, 0.0
    %v771 = vadd.f32 %v769, %v770
    %v772 = vsel %vm578, %v710, 0.0
    %v773 = vadd.f32 %v771, %v772
    %v774 = vsel %vm578, %v712, 0.0
    %v775 = vadd.f32 %v773, %v774
    %v776 = vsel %vm578, %v714, 0.0
    %v777 = vadd.f32 %v775, %v776
    %v778 = vsel %vm578, %v716, 0.0
    %v779 = vadd.f32 %v777, %v778
    %v780 = vsel %vm578, %v718, 0.0
    %v781 = vadd.f32 %v779, %v780
    %v782 = vsel %vm578, %v720, 0.0
    %v783 = vadd.f32 %v781, %v782
    %v784 = vsel %vm578, %v722, 0.0
    %v785 = vadd.f32 %v783, %v784
    %v786 = vsel %vm578, %v724, 0.0
    %v787 = vadd.f32 %v785, %v786
    %v788 = vsel %vm578, %v726, 0.0
    %v789 = vadd.f32 %v787, %v788
    %v790 = vsel %vm578, %v728, 0.0
    %v791 = vadd.f32 %v789, %v790
    %v792 = vsel %vm578, %v730, 0.0
    %v793 = vadd.f32 %v791, %v792
    %v794 = vsel %vm578, %v732, 0.0
    %v795 = vadd.f32 %v793, %v794
    %v796 = vsel %vm578, %v734, 0.0
    %v797 = vadd.f32 %v795, %v796
    %v798 = vsel %vm578, %v736, 0.0
    %v799 = vadd.f32 %v797, %v798
    %v800 = vsel %vm578, %v738, 0.0
    %v801 = vadd.f32 %v799, %v800
    %v802 = vsel %vm578, %v740, 0.0
    %v803 = vadd.f32 %v801, %v802
    %v804 = vsel %vm578, %v742, 0.0
    %v805 = vadd.f32 %v803, %v804
    %v806 = vsel %vm578, %v744, 0.0
    %v807 = vadd.f32 %v805, %v806
    %v808 = vsel %vm578, %v746, 0.0
    %v809 = vadd.f32 %v807, %v808
    %v810 = vsel %vm578, %v748, 0.0
    %v811 = vadd.f32 %v809, %v810
    %v812 = vsel %vm578, %v750, 0.0
    %v813 = vadd.f32 %v811, %v812
    %v814 = vrot.slane %v813, 4
    %v815 = vadd.f32 %v813, %v814
    %v816 = vrot.slane %v815, 2
    %v817 = vadd.f32 %v815, %v816
    %v818 = vrot.slane %v817, 1
    %v819 = vadd.f32 %v817, %v818
    %v820 = vadd.f32 %v653, %v819
    %vm821 = vcmask 122880
    %822 = vst.msk [vmem:[#allocation2 + $0x1] sm:$0x1] %vm821, %v820
    %823 = vst.msk [vmem:[#allocation2] sm:$0x1] %vm821, %v648
    %v824 = vld [vmem:[#allocation2 + $0x2] sm:$0x1]
    %v825 = vsel %vm545, %v381, 0.0
    %v826 = vsel %vm546, %v384, 0.0
    %v827 = vsel %vm547, %v387, 0.0
    %v828 = vsel %vm548, %v390, 0.0
    %v829 = vsel %vm549, %v393, 0.0
    %v830 = vsel %vm550, %v396, 0.0
    %v831 = vsel %vm551, %v399, 0.0
    %v832 = vsel %vm552, %v402, 0.0
    %v833 = vsel %vm553, %v405, 0.0
    %v834 = vsel %vm554, %v408, 0.0
    %v835 = vsel %vm555, %v411, 0.0
    %v836 = vsel %vm556, %v414, 0.0
    %v837 = vsel %vm557, %v417, 0.0
    %v838 = vsel %vm558, %v420, 0.0
    %v839 = vsel %vm559, %v423, 0.0
    %v840 = vsel %vm560, %v426, 0.0
    %v841 = vsel %vm561, %v429, 0.0
    %v842 = vsel %vm562, %v432, 0.0
    %v843 = vsel %vm563, %v435, 0.0
    %v844 = vsel %vm564, %v438, 0.0
    %v845 = vsel %vm565, %v441, 0.0
    %v846 = vsel %vm566, %v444, 0.0
    %v847 = vsel %vm567, %v447, 0.0
    %v848 = vsel %vm568, %v450, 0.0
    %v849 = vsel %vm569, %v453, 0.0
    %v850 = vsel %vm570, %v456, 0.0
    %v851 = vsel %vm571, %v459, 0.0
    %v852 = vsel %vm572, %v462, 0.0
    %v853 = vsel %vm573, %v465, 0.0
    %v854 = vsel %vm574, %v468, 0.0
    %v855 = vsel %vm575, %v471, 0.0
    %v856 = vsel %vm576, %v474, 0.0
    %v857 = vsel %vm578, %v825, 0.0
    %v858 = vsel %vm578, %v826, 0.0
    %v859 = vadd.f32 %v857, %v858
    %v860 = vsel %vm578, %v827, 0.0
    %v861 = vadd.f32 %v859, %v860
    %v862 = vsel %vm578, %v828, 0.0
    %v863 = vadd.f32 %v861, %v862
    %v864 = vsel %vm578, %v829, 0.0
    %v865 = vadd.f32 %v863, %v864
    %v866 = vsel %vm578, %v830, 0.0
    %v867 = vadd.f32 %v865, %v866
    %v868 = vsel %vm578, %v831, 0.0
    %v869 = vadd.f32 %v867, %v868
    %v870 = vsel %vm578, %v832, 0.0
    %v871 = vadd.f32 %v869, %v870
    %v872 = vsel %vm578, %v833, 0.0
    %v873 = vadd.f32 %v871, %v872
    %v874 = vsel %vm578, %v834, 0.0
    %v875 = vadd.f32 %v873, %v874
    %v876 = vsel %vm578, %v835, 0.0
    %v877 = vadd.f32 %v875, %v876
    %v878 = vsel %vm578, %v836, 0.0
    %v879 = vadd.f32 %v877, %v878
    %v880 = vsel %vm578, %v837, 0.0
    %v881 = vadd.f32 %v879, %v880
    %v882 = vsel %vm578, %v838, 0.0
    %v883 = vadd.f32 %v881, %v882
    %v884 = vsel %vm578, %v839, 0.0
    %v885 = vadd.f32 %v883, %v884
    %v886 = vsel %vm578, %v840, 0.0
    %v887 = vadd.f32 %v885, %v886
    %v888 = vsel %vm578, %v841, 0.0
    %v889 = vadd.f32 %v887, %v888
    %v890 = vsel %vm578, %v842, 0.0
    %v891 = vadd.f32 %v889, %v890
    %v892 = vsel %vm578, %v843, 0.0
    %v893 = vadd.f32 %v891, %v892
    %v894 = vsel %vm578, %v844, 0.0
    %v895 = vadd.f32 %v893, %v894
    %v896 = vsel %vm578, %v845, 0.0
    %v897 = vadd.f32 %v895, %v896
    %v898 = vsel %vm578, %v846, 0.0
    %v899 = vadd.f32 %v897, %v898
    %v900 = vsel %vm578, %v847, 0.0
    %v901 = vadd.f32 %v899, %v900
    %v902 = vsel %vm578, %v848, 0.0
    %v903 = vadd.f32 %v901, %v902
    %v904 = vsel %vm578, %v849, 0.0
    %v905 = vadd.f32 %v903, %v904
    %v906 = vsel %vm578, %v850, 0.0
    %v907 = vadd.f32 %v905, %v906
    %v908 = vsel %vm578, %v851, 0.0
    %v909 = vadd.f32 %v907, %v908
    %v910 = vsel %vm578, %v852, 0.0
    %v911 = vadd.f32 %v909, %v910
    %v912 = vsel %vm578, %v853, 0.0
    %v913 = vadd.f32 %v911, %v912
    %v914 = vsel %vm578, %v854, 0.0
    %v915 = vadd.f32 %v913, %v914
    %v916 = vsel %vm578, %v855, 0.0
    %v917 = vadd.f32 %v915, %v916
    %v918 = vsel %vm578, %v856, 0.0
    %v919 = vadd.f32 %v917, %v918
    %v920 = vrot.slane %v919, 4
    %v921 = vadd.f32 %v919, %v920
    %v922 = vrot.slane %v921, 2
    %v923 = vadd.f32 %v921, %v922
    %v924 = vrot.slane %v923, 1
    %v925 = vadd.f32 %v923, %v924
    %v926 = vadd.f32 %v824, %v925
    %927 = vst.msk [vmem:[#allocation2 + $0x2] sm:$0x1] %vm821, %v926
    // Predicated region
    $region38: #{tpu_custom_call.1} parent=1 // pred_check
      %p928 = pneg %p30
    $region39: #{tpu_custom_call.1} parent=1 // pred_check_branch
      %930 = sbr.rel (%p928) target = $region41
    $region40: #{tpu_custom_call.1} parent=1 // pred_region
      %v931 = vld [vmem:[#allocation2] sm:$0x1]
      %v932 = vld [vmem:[#allocation2 + $0x1] sm:$0x1]
      %v933 = vlog2.pop %v932
      %v934 = vmul.f32 %v933, 0.6931472
      %v935 = vadd.f32 %v931, %v934
      %v936 = vld [vmem:[#allocation2 + $0x2] sm:$0x1]
      %v937 = vsub.f32 %v936, %v935
      %v938 = vld [vmem:[%s1] sm:$0x1]
      %v939 = vsub.f32 %v938, %v937
      %v940 = vmul.f32 %v939, 1.442695
      %v941 = vpow.pop %v940
      %v942 = vsub.f32 %v941, %v939
      %v943 = vsub.f32 %v942, 1.0
      %v944 = vld [vmem:[%s2] sm:$0x1]
      %v945 = vsub.f32 %v937, %v944
      %v946 = vmul.f32 %v945, 1.442695
      %v947 = vpow.pop %v946
      %v948 = vmax.f32 %v947, 0.8
      %v949 = vmin.f32 %v948, 1.2
      %v950 = vld [vmem:[%s3] sm:$0x1]
      %v951 = vmul.f32 %v947, %v950
      %v952 = vmul.f32 %v949, %v950
      %v953 = vmin.f32 %v951, %v952
      %v954 = vmul.f32 %v943, 0.04
      %v955 = vsub.f32 %v953, %v954
      %v956 = vsub.f32 0.0, %v955
      %vm957 = vcmp.lt.f32.partialorder %v951, %v952
      %v958 = vsel %vm957, 1, 0
      %v959 = vcvt.s32.f32 %v958
      %v960 = vld [vmem:[%s4] sm:$0x1]
      %v961 = vmul.f32 %v956, %v960
      %v963 = vperm.slane %v943, 0
      %v966 = vrot.slane %v959, 6
      %v969 = vrot.slane %v961, 5
      %vm971 = vcmask 1040384
      %v972 = vsel %vm971, %v937, %v963
      %vm973 = vcmask 1041408
      %v974 = vsel %vm973, %v972, %v966
      %vm975 = vcmask 1042432
      %v976 = vsel %vm975, %v974, %v969
      %vm977 = vcmask 125952
      %978 = vst.msk [vmem:[#allocation3] sm:$0xf] %vm977, %v976
    $region41: #{tpu_custom_call.1} parent=1 // pred_fallthru
      _
    // Predicated region
    $region42: #{tpu_custom_call.1} parent=1 // pred_check
      _
    $region43: #{tpu_custom_call.1} parent=1 // pred_check_branch
      %980 = sbr.rel (0) target = $region45
    $region44: #{tpu_custom_call.1} parent=1 // pred_region
      %982 = vsyncadd [#allocation4], 0
      %s984 = sshll.u32 [#allocation3], 4
      %s985 = int_to_ptr.vmem [resolvable:$true] %s984
      %s986 = sshll.u32 %s8, 4
      %s987 = int_to_ptr.hbm [resolvable:$true] %s986
      %989 = dma.vmem_to_hbm [thread:$0]  %s985, 64, %s987, [#allocation4]
    $region45: #{tpu_custom_call.1} parent=1 // pred_fallthru
      _
    // Predicated region
    $region46: #{tpu_custom_call.1} parent=1 // pred_check
      _
    $region47: #{tpu_custom_call.1} parent=1 // pred_check_branch
      %991 = sbr.rel (0) target = $region49
    $region48: #{tpu_custom_call.1} parent=1 // pred_region
      %993 = dma.done [#allocation4], 64
    $region49: #{tpu_custom_call.1} parent=1 // pred_fallthru
      _
    %994 = vsyncpa [#allocation4], 1

</llo_original>
